<compile_context>
chip_gen: v7x
topology: tpu7x:2x2x1
jax: 0.10.0
libtpu: 0.0.40
codegen_flags: <defaults>
</compile_context>

<pallas_src>
import functools

import jax
import jax.numpy as jnp
from jax.experimental import pallas as pl
from jax.experimental.pallas import tpu as pltpu


def _round_up(x, m):
    return ((x + m - 1) // m) * m


def _actor_kernel(x_ref, w1_ref, b1_ref, w2_ref, b2_ref, w3_ref, b3_ref, o_ref):
    mm_dtype = w1_ref.dtype
    # Layer 1: Linear + ReLU  (bias add / relu in f32, f32 MXU accumulation)
    h = jnp.dot(x_ref[...], w1_ref[...], preferred_element_type=jnp.float32)
    h = jnp.maximum(h + b1_ref[...], 0.0)
    # Layer 2: Linear + ReLU
    h = jnp.dot(h.astype(mm_dtype), w2_ref[...], preferred_element_type=jnp.float32)
    h = jnp.maximum(h + b2_ref[...], 0.0)
    # Output layer: Linear + tanh (all feature dims lane-dense / 128-padded)
    a = jnp.dot(h.astype(mm_dtype), w3_ref[...], preferred_element_type=jnp.float32)
    o_ref[...] = jnp.tanh(a + b3_ref[...])


@functools.partial(jax.jit, static_argnames=("block_rows", "matmul_dtype"))
def actor_forward(obs, w1, b1, w2, b2, w3, b3, *, block_rows=512,
                  matmul_dtype=jnp.bfloat16):
    """obs: (B, dim_obs) f32.  Weights: (in, out) f32.  Biases: (1, out) f32."""
    B, dim_obs = obs.shape
    h1 = w1.shape[1]
    h2 = w2.shape[1]
    dim_action = w3.shape[1]

    # --- lane-dense features: pad every layer's output dim to a 128 multiple.
    # Zero padding is exact: padded hidden columns are relu(0 + 0) = 0 and the
    # matching padded weight rows in the next layer are 0, so they contribute
    # nothing; padded output columns are sliced off below.
    h1p = _round_up(max(h1, 128), 128)
    h2p = _round_up(max(h2, 128), 128)
    n_pad = _round_up(max(dim_action, 128), 128)

    w1p = jnp.pad(w1, ((0, 0), (0, h1p - h1)))
    b1p = jnp.pad(b1, ((0, 0), (0, h1p - h1)))
    w2p = jnp.pad(w2, ((0, h1p - h1), (0, h2p - h2)))
    b2p = jnp.pad(b2, ((0, 0), (0, h2p - h2)))
    w3p = jnp.pad(w3, ((0, h2p - h2), (0, n_pad - dim_action)))
    b3p = jnp.pad(b3, ((0, 0), (0, n_pad - dim_action)))

    # --- batch tiling: tm rows per grid step, pad B to a tile multiple -----
    tm = min(block_rows, _round_up(B, 8))
    b_pad = _round_up(B, tm)
    obs_p = obs if b_pad == B else jnp.pad(obs, ((0, b_pad - B), (0, 0)))
    grid = b_pad // tm

    # bf16 matmul inputs: halves HBM bytes on the obs stream and is the native
    # MXU path on v6e/v7x; biases stay f32, all elementwise math stays f32.
    obs_c = obs_p.astype(matmul_dtype)
    w1_c = w1p.astype(matmul_dtype)
    w2_c = w2p.astype(matmul_dtype)
    w3_c = w3p.astype(matmul_dtype)

    itemsize = jnp.dtype(matmul_dtype).itemsize
    cost = pl.CostEstimate(
        flops=2 * b_pad * (dim_obs * h1p + h1p * h2p + h2p * n_pad),
        transcendentals=b_pad * n_pad,
        bytes_accessed=(b_pad * dim_obs * itemsize              # obs stream in
                        + b_pad * n_pad * 4                     # out stream
                        + (dim_obs * h1p + h1p * h2p + h2p * n_pad) * itemsize
                        + (h1p + h2p + n_pad) * 4),             # resident params
    )

    def resident(shape):
        # Full-array block, constant index -> stays in VMEM across the grid.
        return pl.BlockSpec(shape, lambda i: (0, 0))

    out = pl.pallas_call(
        _actor_kernel,
        out_shape=jax.ShapeDtypeStruct((b_pad, n_pad), jnp.float32),
        grid=(grid,),
        in_specs=[
            pl.BlockSpec((tm, dim_obs), lambda i: (i, 0)),   # streamed obs tile
            resident(w1_c.shape), resident(b1p.shape),       # resident params
            resident(w2_c.shape), resident(b2p.shape),
            resident(w3_c.shape), resident(b3p.shape),
        ],
        out_specs=pl.BlockSpec((tm, n_pad), lambda i: (i, 0)),
        compiler_params=pltpu.CompilerParams(
            dimension_semantics=("parallel",)),
        cost_estimate=cost,
    )(obs_c, w1_c, b1p, w2_c, b2p, w3_c, b3p)

    return out[:B, :dim_action]


def xavier_uniform(key, fan_in, fan_out):
    # Matches torch.nn.init.xavier_uniform_ on a (fan_out, fan_in) weight;
    # stored transposed as (fan_in, fan_out) for the kernel.
    limit = jnp.sqrt(6.0 / (fan_in + fan_out))
    return jax.random.uniform(key, (fan_in, fan_out), jnp.float32,
                              minval=-limit, maxval=limit)


def init_actor_params(key, dim_obs, dim_action, dims_hidden=(64, 64)):
    dims = (dim_obs,) + tuple(dims_hidden) + (dim_action,)
    keys = jax.random.split(key, len(dims) - 1)
    params = []
    for k, d_in, d_out in zip(keys, dims[:-1], dims[1:]):
        w = xavier_uniform(k, d_in, d_out)          # (in, out)
        b = jnp.zeros((1, d_out), jnp.float32)      # zeros_ init, kept 2-D
        params.extend([w, b])
    return params


def actor_forward_ref(obs, w1, b1, w2, b2, w3, b3, matmul_dtype=jnp.bfloat16):
    """Reference using the exact numerical recipe of the kernel."""
    dt = matmul_dtype
    h = jnp.dot(obs.astype(dt), w1.astype(dt), preferred_element_type=jnp.float32)
    h = jnp.maximum(h + b1, 0.0)
    h = jnp.dot(h.astype(dt), w2.astype(dt), preferred_element_type=jnp.float32)
    h = jnp.maximum(h + b2, 0.0)
    a = jnp.dot(h.astype(dt), w3.astype(dt), preferred_element_type=jnp.float32)
    return jnp.tanh(a + b3)


def actor_forward_ref_f32(obs, w1, b1, w2, b2, w3, b3):
    h = jax.nn.relu(obs @ w1 + b1)
    h = jax.nn.relu(h @ w2 + b2)
    return jnp.tanh(h @ w3 + b3)


if __name__ == "__main__":
    key = jax.random.PRNGKey(0)
    k_obs, k_params = jax.random.split(key)

    dim_obs, dim_action = 16, 8
    params = init_actor_params(k_params, dim_obs, dim_action, dims_hidden=(64, 64))

    # Small batch (typical single-env actor call).
    batch = 2
    obs = jax.random.normal(k_obs, (batch, dim_obs), jnp.float32)
    out = jax.block_until_ready(actor_forward(obs, *params))
    ref = actor_forward_ref(obs, *params)
    ref32 = actor_forward_ref_f32(obs, *params)
    assert out.shape == (batch, dim_action)
    assert jnp.allclose(out, ref, atol=1e-4, rtol=1e-4)
    assert jnp.allclose(out, ref32, atol=5e-2, rtol=5e-2)

    # Larger, non-tile-multiple batch to exercise grid > 1 + row padding.
    batch2 = 300
    obs2 = jax.random.normal(jax.random.PRNGKey(1), (batch2, dim_obs), jnp.float32)
    out2 = jax.block_until_ready(actor_forward(obs2, *params, block_rows=128))
    ref2 = actor_forward_ref(obs2, *params)
    assert out2.shape == (batch2, dim_action)
    assert jnp.allclose(out2, ref2, atol=1e-4, rtol=1e-4)

    print("KERNEL_OK")
</pallas_src>

<mosaic_0001>
module attributes {stable_mosaic.version = 11 : i64} {
  func.func @_actor_kernel(%arg0: i32, %arg1: memref<8x16xbf16, #tpu.memory_space<vmem>>, %arg2: memref<16x128xbf16, #tpu.memory_space<vmem>>, %arg3: memref<1x128xf32, #tpu.memory_space<vmem>>, %arg4: memref<128x128xbf16, #tpu.memory_space<vmem>>, %arg5: memref<1x128xf32, #tpu.memory_space<vmem>>, %arg6: memref<128x128xbf16, #tpu.memory_space<vmem>>, %arg7: memref<1x128xf32, #tpu.memory_space<vmem>>, %arg8: memref<8x128xf32, #tpu.memory_space<vmem>>) attributes {dimension_semantics = [#tpu.dimension_semantics<parallel>], iteration_bounds = array<i64: 1>, scalar_prefetch = 0 : i64, scratch_operands = 0 : i64, tpu.core_type = #tpu.core_type<tc>, window_params = [{transform_indices = @transform_0, window_bounds = array<i64: 8, 16>}, {pipeline_mode = #tpu.pipeline_mode<synchronous>, transform_indices = @transform_1, window_bounds = array<i64: 16, 128>}, {pipeline_mode = #tpu.pipeline_mode<synchronous>, transform_indices = @transform_2, window_bounds = array<i64: 1, 128>}, {pipeline_mode = #tpu.pipeline_mode<synchronous>, transform_indices = @transform_3, window_bounds = array<i64: 128, 128>}, {pipeline_mode = #tpu.pipeline_mode<synchronous>, transform_indices = @transform_4, window_bounds = array<i64: 1, 128>}, {pipeline_mode = #tpu.pipeline_mode<synchronous>, transform_indices = @transform_5, window_bounds = array<i64: 128, 128>}, {pipeline_mode = #tpu.pipeline_mode<synchronous>, transform_indices = @transform_6, window_bounds = array<i64: 1, 128>}, {transform_indices = @transform_7, window_bounds = array<i64: 8, 128>}]} {
    %c0 = arith.constant 0 : index
    %c0_0 = arith.constant 0 : index
    %0 = vector.load %arg1[%c0, %c0_0] : memref<8x16xbf16, #tpu.memory_space<vmem>>, vector<8x16xbf16>
    %c0_1 = arith.constant 0 : index
    %c0_2 = arith.constant 0 : index
    %1 = vector.load %arg2[%c0_1, %c0_2] : memref<16x128xbf16, #tpu.memory_space<vmem>>, vector<16x128xbf16>
    %cst = arith.constant dense<0.000000e+00> : vector<8x128xf32>
    %2 = tpu.matmul %0, %1, %cst {dimension_numbers = #tpu.dot_dimension_numbers<[1], [0], [0], [1], [0, 0, 1, 1], [], []>} : vector<8x16xbf16>, vector<16x128xbf16>, vector<8x128xf32> -> vector<8x128xf32>
    %c0_3 = arith.constant 0 : index
    %c0_4 = arith.constant 0 : index
    %3 = vector.load %arg3[%c0_3, %c0_4] : memref<1x128xf32, #tpu.memory_space<vmem>>, vector<1x128xf32>
    %4 = vector.broadcast %3 : vector<1x128xf32> to vector<8x128xf32>
    %5 = arith.addf %2, %4 : vector<8x128xf32>
    %cst_5 = arith.constant 0.000000e+00 : f32
    %6 = vector.broadcast %cst_5 : f32 to vector<8x128xf32>
    %7 = arith.maximumf %5, %6 : vector<8x128xf32>
    %8 = arith.truncf %7 : vector<8x128xf32> to vector<8x128xbf16>
    %c0_6 = arith.constant 0 : index
    %c0_7 = arith.constant 0 : index
    %9 = vector.load %arg4[%c0_6, %c0_7] : memref<128x128xbf16, #tpu.memory_space<vmem>>, vector<128x128xbf16>
    %cst_8 = arith.constant dense<0.000000e+00> : vector<8x128xf32>
    %10 = tpu.matmul %8, %9, %cst_8 {dimension_numbers = #tpu.dot_dimension_numbers<[1], [0], [0], [1], [0, 0, 1, 1], [], []>} : vector<8x128xbf16>, vector<128x128xbf16>, vector<8x128xf32> -> vector<8x128xf32>
    %c0_9 = arith.constant 0 : index
    %c0_10 = arith.constant 0 : index
    %11 = vector.load %arg5[%c0_9, %c0_10] : memref<1x128xf32, #tpu.memory_space<vmem>>, vector<1x128xf32>
    %12 = vector.broadcast %11 : vector<1x128xf32> to vector<8x128xf32>
    %13 = arith.addf %10, %12 : vector<8x128xf32>
    %cst_11 = arith.constant 0.000000e+00 : f32
    %14 = vector.broadcast %cst_11 : f32 to vector<8x128xf32>
    %15 = arith.maximumf %13, %14 : vector<8x128xf32>
    %16 = arith.truncf %15 : vector<8x128xf32> to vector<8x128xbf16>
    %c0_12 = arith.constant 0 : index
    %c0_13 = arith.constant 0 : index
    %17 = vector.load %arg6[%c0_12, %c0_13] : memref<128x128xbf16, #tpu.memory_space<vmem>>, vector<128x128xbf16>
    %cst_14 = arith.constant dense<0.000000e+00> : vector<8x128xf32>
    %18 = tpu.matmul %16, %17, %cst_14 {dimension_numbers = #tpu.dot_dimension_numbers<[1], [0], [0], [1], [0, 0, 1, 1], [], []>} : vector<8x128xbf16>, vector<128x128xbf16>, vector<8x128xf32> -> vector<8x128xf32>
    %c0_15 = arith.constant 0 : index
    %c0_16 = arith.constant 0 : index
    %19 = vector.load %arg7[%c0_15, %c0_16] : memref<1x128xf32, #tpu.memory_space<vmem>>, vector<1x128xf32>
    %20 = vector.broadcast %19 : vector<1x128xf32> to vector<8x128xf32>
    %21 = arith.addf %18, %20 : vector<8x128xf32>
    %22 = math.tanh %21 : vector<8x128xf32>
    %c0_17 = arith.constant 0 : index
    %c0_18 = arith.constant 0 : index
    %23 = vector.load %arg8[%c0_17, %c0_18] : memref<8x128xf32, #tpu.memory_space<vmem>>, vector<8x128xf32>
    tpu.vector_store %arg8[%c0_17, %c0_18], %22 {strides = array<i32>} : memref<8x128xf32, #tpu.memory_space<vmem>>, vector<8x128xf32>,
    return
  }
  func.func @transform_0(%arg0: i32) -> (i32, i32) {
    %c0_i32 = arith.constant 0 : i32
    %c0_i32_0 = arith.constant 0 : i32
    return %arg0, %c0_i32 : i32, i32
  }
  func.func @transform_1(%arg0: i32) -> (i32, i32) {
    %c0_i32 = arith.constant 0 : i32
    %c0_i32_0 = arith.constant 0 : i32
    %c0_i32_1 = arith.constant 0 : i32
    return %c0_i32, %c0_i32_0 : i32, i32
  }
  func.func @transform_2(%arg0: i32) -> (i32, i32) {
    %c0_i32 = arith.constant 0 : i32
    %c0_i32_0 = arith.constant 0 : i32
    %c0_i32_1 = arith.constant 0 : i32
    return %c0_i32, %c0_i32_0 : i32, i32
  }
  func.func @transform_3(%arg0: i32) -> (i32, i32) {
    %c0_i32 = arith.constant 0 : i32
    %c0_i32_0 = arith.constant 0 : i32
    %c0_i32_1 = arith.constant 0 : i32
    return %c0_i32, %c0_i32_0 : i32, i32
  }
  func.func @transform_4(%arg0: i32) -> (i32, i32) {
    %c0_i32 = arith.constant 0 : i32
    %c0_i32_0 = arith.constant 0 : i32
    %c0_i32_1 = arith.constant 0 : i32
    return %c0_i32, %c0_i32_0 : i32, i32
  }
  func.func @transform_5(%arg0: i32) -> (i32, i32) {
    %c0_i32 = arith.constant 0 : i32
    %c0_i32_0 = arith.constant 0 : i32
    %c0_i32_1 = arith.constant 0 : i32
    return %c0_i32, %c0_i32_0 : i32, i32
  }
  func.func @transform_6(%arg0: i32) -> (i32, i32) {
    %c0_i32 = arith.constant 0 : i32
    %c0_i32_0 = arith.constant 0 : i32
    %c0_i32_1 = arith.constant 0 : i32
    return %c0_i32, %c0_i32_0 : i32, i32
  }
  func.func @transform_7(%arg0: i32) -> (i32, i32) {
    %c0_i32 = arith.constant 0 : i32
    %c0_i32_0 = arith.constant 0 : i32
    return %arg0, %c0_i32 : i32, i32
  }
}

</mosaic_0001>

<llo_original>
// kernel: actor_forward.1
$region0: #{actor_forward.1}
  #allocation0 [shape = 'u32[]', space=smem, size = 0x4, offset = 0x4, fixed_abs, tag = 'smem constant byte address 0x4 - core index']
  #allocation1 [shape = 'u32[144,128]{1,0:T(1,128)}', space=vmem, size = 0x12000, scoped, tag = 'internal scratch']
  %s0 = inlined_call_operand.vmem [shape: bf16[8,16], index: 0, kind: input, shape index: {}]
  %s1 = inlined_call_operand.vmem [shape: bf16[16,128], index: 1, kind: input, shape index: {}]
  %s2 = inlined_call_operand.vmem [shape: f32[1,128], index: 2, kind: input, shape index: {}]
  %s3 = inlined_call_operand.vmem [shape: bf16[128,128], index: 3, kind: input, shape index: {}]
  %s4 = inlined_call_operand.vmem [shape: f32[1,128], index: 4, kind: input, shape index: {}]
  %s5 = inlined_call_operand.vmem [shape: bf16[128,128], index: 5, kind: input, shape index: {}]
  %s6 = inlined_call_operand.vmem [shape: f32[1,128], index: 6, kind: input, shape index: {}]
  %s7 = inlined_call_operand.vmem [shape: f32[8,128], index: 7, kind: output, shape index: {}]
  %s8 = sld [smem:[#allocation0]]
  $region38: #{actor_forward.1} parent=0
    _
  %s10 = ssub.s32 1, %s8
  %s11 = scalar_select 0, %s10, %s8
  // Predicated region
  $region2: #{actor_forward.1} parent=0 // pred_check
    _
  $region3: #{actor_forward.1} parent=0 // pred_check_branch
    %13 = sbr.rel (0) target = $region5
  $region4: #{actor_forward.1} parent=0 // pred_region
    _
  $region5: #{actor_forward.1} parent=0 // pred_fallthru
    _
  // Predicated region
  $region6: #{actor_forward.1} parent=0 // pred_check
    _
  $region7: #{actor_forward.1} parent=0 // pred_check_branch
    %15 = sbr.rel (0) target = $region9
  $region8: #{actor_forward.1} parent=0 // pred_region
    _
  $region9: #{actor_forward.1} parent=0 // pred_fallthru
    _
  // Predicated region
  $region10: #{actor_forward.1} parent=0 // pred_check
    _
  $region11: #{actor_forward.1} parent=0 // pred_check_branch
    %17 = sbr.rel (0) target = $region13
  $region12: #{actor_forward.1} parent=0 // pred_region
    _
  $region13: #{actor_forward.1} parent=0 // pred_fallthru
    _
  // Predicated region
  $region14: #{actor_forward.1} parent=0 // pred_check
    _
  $region15: #{actor_forward.1} parent=0 // pred_check_branch
    %19 = sbr.rel (0) target = $region17
  $region16: #{actor_forward.1} parent=0 // pred_region
    _
  $region17: #{actor_forward.1} parent=0 // pred_fallthru
    _
  // Predicated region
  $region18: #{actor_forward.1} parent=0 // pred_check
    _
  $region19: #{actor_forward.1} parent=0 // pred_check_branch
    %21 = sbr.rel (0) target = $region21
  $region20: #{actor_forward.1} parent=0 // pred_region
    _
  $region21: #{actor_forward.1} parent=0 // pred_fallthru
    _
  // Predicated region
  $region22: #{actor_forward.1} parent=0 // pred_check
    _
  $region23: #{actor_forward.1} parent=0 // pred_check_branch
    %23 = sbr.rel (0) target = $region25
  $region24: #{actor_forward.1} parent=0 // pred_region
    _
  $region25: #{actor_forward.1} parent=0 // pred_fallthru
    _
  // Predicated region
  $region26: #{actor_forward.1} parent=0 // pred_check
    _
  $region27: #{actor_forward.1} parent=0 // pred_check_branch
    %25 = sbr.rel (0) target = $region29
  $region28: #{actor_forward.1} parent=0 // pred_region
    _
  $region29: #{actor_forward.1} parent=0 // pred_fallthru
    _
  %v27 = vld [vmem:[%s0] sm:$0xf]
  %v28 = vld [vmem:[%s1] sm:$0xf]
  %v29 = vld [vmem:[%s1 + $0x4] sm:$0xf]
  %v30 = vld [vmem:[%s2] sm:$0x1]
  %v32 = vlaneseq
  %v33 = vshrl.u32 %v32, 7
  %v34 = vsub.s32 0, %v33
  %v35 = vrot.slane %v30, %v34
  %v39 = vunpack.c.l.b16 %v28
  %v40 = vunpack.c.l.b16 %v29
  %v41 = vpack.c.b16 %v40, %v39
  %vm43 = vcmask 130048
  %v45 = vsel %vm43, %v27, 0
  %47 = vmatprep.subr.bf16.mxu0 0
  %48 = vmatpush1.bf16.msra.mxu0 %v41
  %49 = vmatprep.subr.bf16.mxu0 0
  %50 = vmatpush1.bf16.msra.mxu0 0
  %51 = vmatprep.subr.bf16.mxu0 0
  %52 = vmatpush1.bf16.msra.mxu0 0
  %53 = vmatprep.subr.bf16.mxu0 0
  %54 = vmatpush1.bf16.msra.mxu0 0
  %55 = vmatprep.subr.bf16.mxu0 0
  %56 = vmatpush1.bf16.msra.mxu0 0
  %57 = vmatprep.subr.bf16.mxu0 0
  %58 = vmatpush1.bf16.msra.mxu0 0
  %59 = vmatprep.subr.bf16.mxu0 0
  %60 = vmatpush1.bf16.msra.mxu0 0
  %61 = vmatprep.subr.bf16.mxu0 0
  %62 = vmatpush1.bf16.msra.mxu0 0
  %63 = vmatprep.subr.bf16.mxu0 0
  %64 = vmatpush1.bf16.msra.mxu0 0
  %65 = vmatprep.subr.bf16.mxu0 0
  %66 = vmatpush1.bf16.msra.mxu0 0
  %67 = vmatprep.subr.bf16.mxu0 0
  %68 = vmatpush1.bf16.msra.mxu0 0
  %69 = vmatprep.subr.bf16.mxu0 0
  %70 = vmatpush1.bf16.msra.mxu0 0
  %71 = vmatprep.subr.bf16.mxu0 0
  %72 = vmatpush1.bf16.msra.mxu0 0
  %73 = vmatprep.subr.bf16.mxu0 0
  %74 = vmatpush1.bf16.msra.mxu0 0
  %75 = vmatprep.subr.bf16.mxu0 0
  %76 = vmatpush1.bf16.msra.mxu0 0
  %77 = vmatprep.subr.bf16.mxu0 0
  %78 = vmatpush1.bf16.msra.mxu0 0
  %79 = vmatprep.mubr.bf16.mxu0 0
  %80 = vmatmul.mubr.bf16.gmra.mrb[0].mxu0 %v45
  %v81 = vpop.f32.mrb[0].mxu0
  %v82 = vadd.f32 %v35, %v81
  %v83 = vpop.f32.mrb[0].mxu0
  %v84 = vpop.f32.mrb[0].mxu0
  %v85 = vpop.f32.mrb[0].mxu0
  %86 = vdwg.mxu0
  %v87 = vmax.f32 %v82, 0.0
  %v88 = vpack.c.bf16 %v87, %v87
  %v89 = vld [vmem:[%s3] sm:$0xf]
  %v90 = vld [vmem:[%s3 + $0x4] sm:$0xf]
  %v91 = vld [vmem:[%s3 + $0x8] sm:$0xf]
  %v92 = vld [vmem:[%s3 + $0xc] sm:$0xf]
  %v93 = vld [vmem:[%s3 + $0x10] sm:$0xf]
  %v94 = vld [vmem:[%s3 + $0x14] sm:$0xf]
  %v95 = vld [vmem:[%s3 + $0x18] sm:$0xf]
  %v96 = vld [vmem:[%s3 + $0x1c] sm:$0xf]
  %v97 = vld [vmem:[%s3 + $0x20] sm:$0xf]
  %v98 = vld [vmem:[%s3 + $0x24] sm:$0xf]
  %v99 = vld [vmem:[%s3 + $0x28] sm:$0xf]
  %v100 = vld [vmem:[%s3 + $0x2c] sm:$0xf]
  %v101 = vld [vmem:[%s3 + $0x30] sm:$0xf]
  %v102 = vld [vmem:[%s3 + $0x34] sm:$0xf]
  %v103 = vld [vmem:[%s3 + $0x38] sm:$0xf]
  %v104 = vld [vmem:[%s3 + $0x3c] sm:$0xf]
  %v105 = vld [vmem:[%s4] sm:$0x1]
  %v107 = vlaneseq
  %v108 = vshrl.u32 %v107, 7
  %v109 = vsub.s32 0, %v108
  %v110 = vrot.slane %v105, %v109
  %v128 = vunpack.c.l.b16 %v89
  %v129 = vunpack.c.l.b16 %v90
  %v130 = vunpack.c.l.b16 %v91
  %v131 = vunpack.c.l.b16 %v92
  %v132 = vunpack.c.l.b16 %v93
  %v133 = vunpack.c.l.b16 %v94
  %v134 = vunpack.c.l.b16 %v95
  %v135 = vunpack.c.l.b16 %v96
  %v136 = vunpack.c.l.b16 %v97
  %v137 = vunpack.c.l.b16 %v98
  %v138 = vunpack.c.l.b16 %v99
  %v139 = vunpack.c.l.b16 %v100
  %v140 = vunpack.c.l.b16 %v101
  %v141 = vunpack.c.l.b16 %v102
  %v142 = vunpack.c.l.b16 %v103
  %v143 = vunpack.c.l.b16 %v104
  %v144 = vpack.c.b16 %v129, %v128
  %v145 = vpack.c.b16 %v131, %v130
  %v146 = vpack.c.b16 %v133, %v132
  %v147 = vpack.c.b16 %v135, %v134
  %v148 = vpack.c.b16 %v137, %v136
  %v149 = vpack.c.b16 %v139, %v138
  %v150 = vpack.c.b16 %v141, %v140
  %v151 = vpack.c.b16 %v143, %v142
  %160 = vmatprep.subr.bf16.mxu0 0
  %161 = vmatpush1.bf16.msra.mxu0 %v144
  %162 = vmatprep.subr.bf16.mxu0 0
  %163 = vmatpush1.bf16.msra.mxu0 %v145
  %164 = vmatprep.subr.bf16.mxu0 0
  %165 = vmatpush1.bf16.msra.mxu0 %v146
  %166 = vmatprep.subr.bf16.mxu0 0
  %167 = vmatpush1.bf16.msra.mxu0 %v147
  %168 = vmatprep.subr.bf16.mxu0 0
  %169 = vmatpush1.bf16.msra.mxu0 %v148
  %170 = vmatprep.subr.bf16.mxu0 0
  %171 = vmatpush1.bf16.msra.mxu0 %v149
  %172 = vmatprep.subr.bf16.mxu0 0
  %173 = vmatpush1.bf16.msra.mxu0 %v150
  %174 = vmatprep.subr.bf16.mxu0 0
  %175 = vmatpush1.bf16.msra.mxu0 %v151
  %176 = vmatprep.subr.bf16.mxu0 0
  %177 = vmatpush1.bf16.msra.mxu0 0
  %178 = vmatprep.subr.bf16.mxu0 0
  %179 = vmatpush1.bf16.msra.mxu0 0
  %180 = vmatprep.subr.bf16.mxu0 0
  %181 = vmatpush1.bf16.msra.mxu0 0
  %182 = vmatprep.subr.bf16.mxu0 0
  %183 = vmatpush1.bf16.msra.mxu0 0
  %184 = vmatprep.subr.bf16.mxu0 0
  %185 = vmatpush1.bf16.msra.mxu0 0
  %186 = vmatprep.subr.bf16.mxu0 0
  %187 = vmatpush1.bf16.msra.mxu0 0
  %188 = vmatprep.subr.bf16.mxu0 0
  %189 = vmatpush1.bf16.msra.mxu0 0
  %190 = vmatprep.subr.bf16.mxu0 0
  %191 = vmatpush1.bf16.msra.mxu0 0
  %192 = vmatprep.mubr.bf16.mxu0 0
  %193 = vmatmul.mubr.bf16.gmra.mrb[0].mxu0 %v88
  %v194 = vpop.f32.mrb[0].mxu0
  %v195 = vadd.f32 %v110, %v194
  %v196 = vpop.f32.mrb[0].mxu0
  %v197 = vpop.f32.mrb[0].mxu0
  %v198 = vpop.f32.mrb[0].mxu0
  %199 = vdwg.mxu0
  %v200 = vmax.f32 %v195, 0.0
  %v201 = vpack.c.bf16 %v200, %v200
  %v202 = vld [vmem:[%s5] sm:$0xf]
  %v203 = vld [vmem:[%s5 + $0x4] sm:$0xf]
  %v204 = vld [vmem:[%s5 + $0x8] sm:$0xf]
  %v205 = vld [vmem:[%s5 + $0xc] sm:$0xf]
  %v206 = vld [vmem:[%s5 + $0x10] sm:$0xf]
  %v207 = vld [vmem:[%s5 + $0x14] sm:$0xf]
  %v208 = vld [vmem:[%s5 + $0x18] sm:$0xf]
  %v209 = vld [vmem:[%s5 + $0x1c] sm:$0xf]
  %v210 = vld [vmem:[%s5 + $0x20] sm:$0xf]
  %v211 = vld [vmem:[%s5 + $0x24] sm:$0xf]
  %v212 = vld [vmem:[%s5 + $0x28] sm:$0xf]
  %v213 = vld [vmem:[%s5 + $0x2c] sm:$0xf]
  %v214 = vld [vmem:[%s5 + $0x30] sm:$0xf]
  %v215 = vld [vmem:[%s5 + $0x34] sm:$0xf]
  %v216 = vld [vmem:[%s5 + $0x38] sm:$0xf]
  %v217 = vld [vmem:[%s5 + $0x3c] sm:$0xf]
  %v218 = vld [vmem:[%s6] sm:$0x1]
  %v220 = vlaneseq
  %v221 = vshrl.u32 %v220, 7
  %v222 = vsub.s32 0, %v221
  %v223 = vrot.slane %v218, %v222
  %v241 = vunpack.c.l.b16 %v202
  %v242 = vunpack.c.l.b16 %v203
  %v243 = vunpack.c.l.b16 %v204
  %v244 = vunpack.c.l.b16 %v205
  %v245 = vunpack.c.l.b16 %v206
  %v246 = vunpack.c.l.b16 %v207
  %v247 = vunpack.c.l.b16 %v208
  %v248 = vunpack.c.l.b16 %v209
  %v249 = vunpack.c.l.b16 %v210
  %v250 = vunpack.c.l.b16 %v211
  %v251 = vunpack.c.l.b16 %v212
  %v252 = vunpack.c.l.b16 %v213
  %v253 = vunpack.c.l.b16 %v214
  %v254 = vunpack.c.l.b16 %v215
  %v255 = vunpack.c.l.b16 %v216
  %v256 = vunpack.c.l.b16 %v217
  %v257 = vpack.c.b16 %v242, %v241
  %v258 = vpack.c.b16 %v244, %v243
  %v259 = vpack.c.b16 %v246, %v245
  %v260 = vpack.c.b16 %v248, %v247
  %v261 = vpack.c.b16 %v250, %v249
  %v262 = vpack.c.b16 %v252, %v251
  %v263 = vpack.c.b16 %v254, %v253
  %v264 = vpack.c.b16 %v256, %v255
  %273 = vmatprep.subr.bf16.mxu0 0
  %274 = vmatpush1.bf16.msra.mxu0 %v257
  %275 = vmatprep.subr.bf16.mxu0 0
  %276 = vmatpush1.bf16.msra.mxu0 %v258
  %277 = vmatprep.subr.bf16.mxu0 0
  %278 = vmatpush1.bf16.msra.mxu0 %v259
  %279 = vmatprep.subr.bf16.mxu0 0
  %280 = vmatpush1.bf16.msra.mxu0 %v260
  %281 = vmatprep.subr.bf16.mxu0 0
  %282 = vmatpush1.bf16.msra.mxu0 %v261
  %283 = vmatprep.subr.bf16.mxu0 0
  %284 = vmatpush1.bf16.msra.mxu0 %v262
  %285 = vmatprep.subr.bf16.mxu0 0
  %286 = vmatpush1.bf16.msra.mxu0 %v263
  %287 = vmatprep.subr.bf16.mxu0 0
  %288 = vmatpush1.bf16.msra.mxu0 %v264
  %289 = vmatprep.subr.bf16.mxu0 0
  %290 = vmatpush1.bf16.msra.mxu0 0
  %291 = vmatprep.subr.bf16.mxu0 0
  %292 = vmatpush1.bf16.msra.mxu0 0
  %293 = vmatprep.subr.bf16.mxu0 0
  %294 = vmatpush1.bf16.msra.mxu0 0
  %295 = vmatprep.subr.bf16.mxu0 0
  %296 = vmatpush1.bf16.msra.mxu0 0
  %297 = vmatprep.subr.bf16.mxu0 0
  %298 = vmatpush1.bf16.msra.mxu0 0
  %299 = vmatprep.subr.bf16.mxu0 0
  %300 = vmatpush1.bf16.msra.mxu0 0
  %301 = vmatprep.subr.bf16.mxu0 0
  %302 = vmatpush1.bf16.msra.mxu0 0
  %303 = vmatprep.subr.bf16.mxu0 0
  %304 = vmatpush1.bf16.msra.mxu0 0
  %305 = vmatprep.mubr.bf16.mxu0 0
  %306 = vmatmul.mubr.bf16.gmra.mrb[0].mxu0 %v201
  %v307 = vpop.f32.mrb[0].mxu0
  %v308 = vadd.f32 %v223, %v307
  %v309 = vpop.f32.mrb[0].mxu0
  %v310 = vpop.f32.mrb[0].mxu0
  %v311 = vpop.f32.mrb[0].mxu0
  %312 = vdwg.mxu0
  %v313 = vtanh.pop %v308
  %314 = vst [vmem:[%s7] sm:$0xff] %v313
  // Predicated region
  $region30: #{actor_forward.1} parent=0 // pred_check
    _
  $region31: #{actor_forward.1} parent=0 // pred_check_branch
    %316 = sbr.rel (0) target = $region33
  $region32: #{actor_forward.1} parent=0 // pred_region
    _
  $region33: #{actor_forward.1} parent=0 // pred_fallthru
    _
  // Predicated region
  $region34: #{actor_forward.1} parent=0 // pred_check
    _
  $region35: #{actor_forward.1} parent=0 // pred_check_branch
    %318 = sbr.rel (0) target = $region37
  $region36: #{actor_forward.1} parent=0 // pred_region
    _
  $region37: #{actor_forward.1} parent=0 // pred_fallthru
    _

</llo_original>
